<compile_context>
chip_gen: v7x
topology: tpu7x:2x2x1
jax: 0.10.0
libtpu: 0.0.40
codegen_flags: <defaults>
</compile_context>

<pallas_src>
import functools
import math

import jax
import jax.numpy as jnp
from jax import lax
from jax.experimental import pallas as pl
from jax.experimental.pallas import tpu as pltpu

# ----------------------------- config ---------------------------------------
VOCAB = 512          # TODO(synk): real bert-base-uncased vocab is 30522 (reduced for synthetic init)
MAX_POS = 64         # TODO(synk): real max_position_embeddings is 512
TYPE_VOCAB = 2
HIDDEN = 768
N_LAYERS = 2         # TODO(synk): real bert-base has 12 layers; depth reduced, per-layer math identical
N_HEADS = 12
HEAD_DIM = HIDDEN // N_HEADS
INTERMEDIATE = 3072
LN_EPS = 1e-12

ACT_DTYPE = jnp.bfloat16          # storage / MXU-input dtype
VMEM_LIMIT = 32 * 1024 * 1024     # explicit scoped-VMEM budget (safe on v5e/v6e/v7x)


def _cparams(*sems):
    return pltpu.CompilerParams(dimension_semantics=sems,
                                vmem_limit_bytes=VMEM_LIMIT)


def _pick_tile(dim, candidates):
    for t in candidates:
        if dim % t == 0:
            return t
    return dim


# ----------------------- dense (weight-resident matmul) ----------------------
def _dense_kernel(x_ref, w_ref, b_ref, o_ref, *, activation):
    # bf16 x bf16 -> f32 accumulation on the MXU; epilogue math in f32.
    acc = jnp.dot(x_ref[...], w_ref[...], preferred_element_type=jnp.float32)
    acc = acc + b_ref[...].astype(jnp.float32)
    if activation == "gelu":
        # tanh-approximate GELU. TODO(synk): HF bert uses exact erf-based GELU.
        c = math.sqrt(2.0 / math.pi)
        acc = 0.5 * acc * (1.0 + jnp.tanh(c * (acc + 0.044715 * acc * acc * acc)))
    elif activation == "tanh":
        acc = jnp.tanh(acc)
    o_ref[...] = acc.astype(o_ref.dtype)


def _ln_math(x, g, b):
    mu = jnp.mean(x, axis=-1, keepdims=True)
    xc = x - mu
    var = jnp.mean(xc * xc, axis=-1, keepdims=True)
    inv = lax.rsqrt(var + LN_EPS)
    return xc * inv * g + b


def _dense_add_ln_kernel(x_ref, w_ref, b_ref, r_ref, g_ref, bln_ref, o_ref):
    # dense -> + residual -> LayerNorm, all in one epilogue (full N per tile).
    acc = jnp.dot(x_ref[...], w_ref[...], preferred_element_type=jnp.float32)
    acc = acc + b_ref[...].astype(jnp.float32)
    acc = acc + r_ref[...].astype(jnp.float32)
    out = _ln_math(acc, g_ref[...].astype(jnp.float32),
                   bln_ref[...].astype(jnp.float32))
    o_ref[...] = out.astype(o_ref.dtype)


def dense(x, w, b, activation="none", out_dtype=None):
    """x: (M, K) @ w: (K, N) + b: (N,).  Weight VMEM-resident, grid over M only."""
    M, K = x.shape
    K2, N = w.shape
    assert K == K2
    out_dtype = out_dtype or x.dtype
    tm = _pick_tile(M, (512, 256, 128, 64, 32, 16, 8))
    kernel = functools.partial(_dense_kernel, activation=activation)
    return pl.pallas_call(
        kernel,
        out_shape=jax.ShapeDtypeStruct((M, N), out_dtype),
        grid=(M // tm,),
        in_specs=[
            pl.BlockSpec((tm, K), lambda i: (i, 0)),   # streamed activations
            pl.BlockSpec((K, N), lambda i: (0, 0)),    # weight fetched once, stays resident
            pl.BlockSpec((1, N), lambda i: (0, 0)),
        ],
        out_specs=pl.BlockSpec((tm, N), lambda i: (i, 0)),
        compiler_params=_cparams("parallel"),
    )(x, w, b.reshape(1, N))


def dense_add_ln(x, w, b, residual, gamma, beta, out_dtype=None):
    """Fused: (x @ w + b + residual) -> LayerNorm(gamma, beta).  N must be full per tile."""
    M, K = x.shape
    K2, N = w.shape
    assert K == K2 and residual.shape == (M, N)
    out_dtype = out_dtype or x.dtype
    tm = _pick_tile(M, (512, 256, 128, 64, 32, 16, 8))
    return pl.pallas_call(
        _dense_add_ln_kernel,
        out_shape=jax.ShapeDtypeStruct((M, N), out_dtype),
        grid=(M // tm,),
        in_specs=[
            pl.BlockSpec((tm, K), lambda i: (i, 0)),
            pl.BlockSpec((K, N), lambda i: (0, 0)),    # weight resident
            pl.BlockSpec((1, N), lambda i: (0, 0)),
            pl.BlockSpec((tm, N), lambda i: (i, 0)),   # residual streamed alongside x
            pl.BlockSpec((1, N), lambda i: (0, 0)),
            pl.BlockSpec((1, N), lambda i: (0, 0)),
        ],
        out_specs=pl.BlockSpec((tm, N), lambda i: (i, 0)),
        compiler_params=_cparams("parallel"),
    )(x, w, b.reshape(1, N), residual, gamma.reshape(1, N), beta.reshape(1, N))


# ----------------------- LayerNorm (embeddings only) -------------------------
def _ln_kernel(x_ref, g_ref, b_ref, o_ref):
    x = x_ref[...].astype(jnp.float32)
    o_ref[...] = _ln_math(x, g_ref[...].astype(jnp.float32),
                          b_ref[...].astype(jnp.float32)).astype(o_ref.dtype)


def layer_norm(x, gamma, beta, out_dtype=None):
    M, H = x.shape
    out_dtype = out_dtype or x.dtype
    tm = _pick_tile(M, (512, 256, 128, 64, 32, 16, 8))
    return pl.pallas_call(
        _ln_kernel,
        out_shape=jax.ShapeDtypeStruct((M, H), out_dtype),
        grid=(M // tm,),
        in_specs=[
            pl.BlockSpec((tm, H), lambda i: (i, 0)),
            pl.BlockSpec((1, H), lambda i: (0, 0)),
            pl.BlockSpec((1, H), lambda i: (0, 0)),
        ],
        out_specs=pl.BlockSpec((tm, H), lambda i: (i, 0)),
        compiler_params=_cparams("parallel"),
    )(x, gamma.reshape(1, H), beta.reshape(1, H))


# ----------------------- multi-head self-attention ---------------------------
def _attn_kernel(q_ref, k_ref, v_ref, bias_ref, o_ref, *, scale, head_dim):
    # One (batch, head-pair) grid step: q/k/v refs are (S, 2*head_dim) = (S, 128)
    # tiles carved straight out of the fused (B, S, 3H) QKV tensor by the
    # BlockSpec index maps (128-lane aligned, lane-dense DMAs).
    bias = bias_ref[...].astype(jnp.float32)     # (1, S) additive mask
    ctxs = []
    for h in range(2):                           # two heads per 128-lane tile
        lo = h * head_dim
        qh = q_ref[:, lo:lo + head_dim]          # static ref sub-slice -> narrow load
        kh = k_ref[:, lo:lo + head_dim]
        vh = v_ref[:, lo:lo + head_dim]
        s = lax.dot_general(qh, kh, (((1,), (1,)), ((), ())),
                            preferred_element_type=jnp.float32) * scale + bias
        s = s - jnp.max(s, axis=-1, keepdims=True)
        p = jnp.exp(s)
        # approx reciprocal runs on the EUP; acceptable inference-time drift.
        p = p * pl.reciprocal(jnp.sum(p, axis=-1, keepdims=True), approx=True)
        ctxs.append(jnp.dot(p.astype(vh.dtype), vh,
                            preferred_element_type=jnp.float32))
    # single lane-dense, 128-wide, 128-aligned store per grid step
    o_ref[...] = jnp.concatenate(ctxs, axis=-1).astype(o_ref.dtype)


def attention(qkv, mask_bias):
    """qkv: (B, S, 3H) fused; mask_bias: (B, 1, S) additive. Returns (B, S, H)."""
    B, S, threeH = qkv.shape
    H = threeH // 3
    n_pairs = N_HEADS // 2                       # 2 heads = 128 lanes per grid step
    pair_w = 2 * HEAD_DIM                        # 128
    kernel = functools.partial(_attn_kernel, scale=1.0 / math.sqrt(HEAD_DIM),
                               head_dim=HEAD_DIM)
    return pl.pallas_call(
        kernel,
        out_shape=jax.ShapeDtypeStruct((B, S, H), qkv.dtype),
        grid=(B, n_pairs),
        in_specs=[
            # the same fused QKV array is passed three times; offset index maps
            # select the Q / K / V slab for this head pair (128-aligned).
            pl.BlockSpec((None, S, pair_w), lambda b, j: (b, 0, j)),
            pl.BlockSpec((None, S, pair_w), lambda b, j: (b, 0, j + n_pairs)),
            pl.BlockSpec((None, S, pair_w), lambda b, j: (b, 0, j + 2 * n_pairs)),
            pl.BlockSpec((None, 1, S), lambda b, j: (b, 0, 0)),
        ],
        out_specs=pl.BlockSpec((None, S, pair_w), lambda b, j: (b, 0, j)),
        compiler_params=_cparams("parallel", "parallel"),
    )(qkv, qkv, qkv, mask_bias)


# ----------------------- pooler + classifier head ----------------------------
def _head_kernel(x_ref, pw_ref, pb_ref, cw_ref, cb_ref, o_ref):
    pooled = jnp.dot(x_ref[...], pw_ref[...], preferred_element_type=jnp.float32)
    pooled = jnp.tanh(pooled + pb_ref[...].astype(jnp.float32))
    # Linear(768, 1): row-wise dot via multiply + lane reduce (avoids 1-wide matmul).
    logits = jnp.sum(pooled * cw_ref[...].astype(jnp.float32),
                     axis=-1, keepdims=True)
    o_ref[...] = (logits + cb_ref[...].astype(jnp.float32)).astype(o_ref.dtype)


def pooler_classifier(cls, pool_w, pool_b, cls_w, cls_b):
    B, H = cls.shape
    return pl.pallas_call(
        _head_kernel,
        out_shape=jax.ShapeDtypeStruct((B, 1), jnp.float32),
        grid=(1,),
        in_specs=[
            pl.BlockSpec((B, H), lambda i: (0, 0)),
            pl.BlockSpec((H, H), lambda i: (0, 0)),
            pl.BlockSpec((1, H), lambda i: (0, 0)),
            pl.BlockSpec((1, H), lambda i: (0, 0)),
            pl.BlockSpec((1, 1), lambda i: (0, 0)),
        ],
        out_specs=pl.BlockSpec((B, 1), lambda i: (0, 0)),
        compiler_params=_cparams("arbitrary"),
    )(cls, pool_w, pool_b.reshape(1, H), cls_w.reshape(1, H), cls_b.reshape(1, 1))


# ----------------------------- BERT pieces -----------------------------------
def bert_layer(hidden, mask_bias, p):
    B, S, H = hidden.shape
    x2d = hidden.reshape(B * S, H)

    # fused Q/K/V projection: one weight-resident matmul, X streamed once.
    qkv = dense(x2d, p["qkv_w"], p["qkv_b"])                    # (B*S, 3H)
    ctx = attention(qkv.reshape(B, S, 3 * H), mask_bias)        # (B, S, H)

    # attention-output dense fused with residual add + LayerNorm
    hidden1 = dense_add_ln(ctx.reshape(B * S, H), p["ao_w"], p["ao_b"],
                           x2d, p["ln1_g"], p["ln1_b"])

    inter = dense(hidden1, p["i_w"], p["i_b"], activation="gelu")
    # FFN-output dense fused with residual add + LayerNorm
    hidden2 = dense_add_ln(inter, p["o_w"], p["o_b"],
                           hidden1, p["ln2_g"], p["ln2_b"])
    return hidden2.reshape(B, S, H)


def forward(params, ids, mask, token_type_ids):
    """Equivalent of BERTBasedUncased.forward(ids, mask, token_type_ids)."""
    B, S = ids.shape
    # embeddings (gathers are XLA glue; LN is a Pallas kernel)
    we = jnp.take(params["word_emb"], ids, axis=0)
    pe = params["pos_emb"][:S][None, :, :]
    te = jnp.take(params["type_emb"], token_type_ids, axis=0)
    emb = (we + pe + te).reshape(B * S, HIDDEN)
    hidden = layer_norm(emb, params["emb_ln_g"], params["emb_ln_b"],
                        out_dtype=ACT_DTYPE)
    hidden = hidden.reshape(B, S, HIDDEN)

    # extended attention mask: (1 - mask) * -10000, shape (B, 1, S)
    mask_bias = (1.0 - mask.astype(jnp.float32))[:, None, :] * -10000.0

    for lp in params["layers"]:
        hidden = bert_layer(hidden, mask_bias, lp)

    # pooler (dense + tanh on [CLS]) fused with the classifier head.
    # bert_drop = nn.Dropout(0.3): identity in eval/inference mode.
    cls = hidden[:, 0, :]                                         # (B, 768)
    logits = pooler_classifier(cls, params["pool_w"], params["pool_b"],
                               params["cls_w"], params["cls_b"])  # (B, 1) f32
    return logits


# ----------------------------- params ----------------------------------------
def init_params(key):
    cnt = [0]

    def nrm(shape, std=0.02, dtype=ACT_DTYPE):
        cnt[0] += 1
        return (jax.random.normal(jax.random.fold_in(key, cnt[0]), shape,
                                  jnp.float32) * std).astype(dtype)

    def zeros(shape):
        return jnp.zeros(shape, jnp.float32)

    def ones(shape):
        return jnp.ones(shape, jnp.float32)

    params = {
        "word_emb": nrm((VOCAB, HIDDEN), dtype=jnp.float32),
        "pos_emb": nrm((MAX_POS, HIDDEN), dtype=jnp.float32),
        "type_emb": nrm((TYPE_VOCAB, HIDDEN), dtype=jnp.float32),
        "emb_ln_g": ones((HIDDEN,)),
        "emb_ln_b": zeros((HIDDEN,)),
        "pool_w": nrm((HIDDEN, HIDDEN)),
        "pool_b": zeros((HIDDEN,)),
        "cls_w": nrm((HIDDEN, 1)),
        "cls_b": zeros((1,)),
        "layers": [],
    }
    for _ in range(N_LAYERS):
        q_w = nrm((HIDDEN, HIDDEN))
        k_w = nrm((HIDDEN, HIDDEN))
        v_w = nrm((HIDDEN, HIDDEN))
        params["layers"].append({
            "qkv_w": jnp.concatenate([q_w, k_w, v_w], axis=1),      # (768, 2304)
            "qkv_b": jnp.concatenate([zeros((HIDDEN,))] * 3),       # (2304,)
            "ao_w": nrm((HIDDEN, HIDDEN)), "ao_b": zeros((HIDDEN,)),
            "ln1_g": ones((HIDDEN,)), "ln1_b": zeros((HIDDEN,)),
            "i_w": nrm((HIDDEN, INTERMEDIATE)), "i_b": zeros((INTERMEDIATE,)),
            "o_w": nrm((INTERMEDIATE, HIDDEN)), "o_b": zeros((HIDDEN,)),
            "ln2_g": ones((HIDDEN,)), "ln2_b": zeros((HIDDEN,)),
        })
    return params


# ------------------------------- main -----------------------------------------
if __name__ == "__main__":
    B, S = 2, 8
    key = jax.random.PRNGKey(0)
    k_ids, k_params = jax.random.split(key)

    ids = jax.random.randint(k_ids, (B, S), 0, VOCAB, dtype=jnp.int32)
    mask = jnp.ones((B, S), jnp.int32).at[1, 6:].set(0)      # pad last 2 tokens of row 1
    token_type_ids = jnp.zeros((B, S), jnp.int32)

    params = init_params(k_params)

    out = forward(params, ids, mask, token_type_ids)
    out = jax.block_until_ready(out)

    assert out.shape == (B, 1) and out.dtype == jnp.float32
    assert bool(jnp.all(jnp.isfinite(out)))
    print("KERNEL_OK")
</pallas_src>

<mosaic_0001>
module attributes {stable_mosaic.version = 11 : i64} {
  func.func @_ln_kernel(%arg0: i32, %arg1: memref<16x768xf32, #tpu.memory_space<vmem>>, %arg2: memref<1x768xf32, #tpu.memory_space<vmem>>, %arg3: memref<1x768xf32, #tpu.memory_space<vmem>>, %arg4: memref<16x768xbf16, #tpu.memory_space<vmem>>) attributes {dimension_semantics = [#tpu.dimension_semantics<parallel>], iteration_bounds = array<i64: 1>, scalar_prefetch = 0 : i64, scratch_operands = 0 : i64, tpu.core_type = #tpu.core_type<tc>, window_params = [{transform_indices = @transform_0, window_bounds = array<i64: 16, 768>}, {pipeline_mode = #tpu.pipeline_mode<synchronous>, transform_indices = @transform_1, window_bounds = array<i64: 1, 768>}, {pipeline_mode = #tpu.pipeline_mode<synchronous>, transform_indices = @transform_2, window_bounds = array<i64: 1, 768>}, {transform_indices = @transform_3, window_bounds = array<i64: 16, 768>}]} {
    %c0 = arith.constant 0 : index
    %c0_0 = arith.constant 0 : index
    %0 = vector.load %arg1[%c0, %c0_0] : memref<16x768xf32, #tpu.memory_space<vmem>>, vector<16x768xf32>
    %c0_1 = arith.constant 0 : index
    %c0_2 = arith.constant 0 : index
    %1 = vector.load %arg2[%c0_1, %c0_2] : memref<1x768xf32, #tpu.memory_space<vmem>>, vector<1x768xf32>
    %c0_3 = arith.constant 0 : index
    %c0_4 = arith.constant 0 : index
    %2 = vector.load %arg3[%c0_3, %c0_4] : memref<1x768xf32, #tpu.memory_space<vmem>>, vector<1x768xf32>
    %cst = arith.constant dense<0.000000e+00> : vector<16xf32>
    %3 = vector.multi_reduction <add>, %0, %cst [1] : vector<16x768xf32> to vector<16xf32>
    %4 = vector.shape_cast %3 : vector<16xf32> to vector<16x1xf32>
    %cst_5 = arith.constant 7.680000e+02 : f32
    %5 = vector.broadcast %cst_5 : f32 to vector<16x1xf32>
    %6 = arith.divf %4, %5 : vector<16x1xf32>
    %7 = vector.broadcast %6 : vector<16x1xf32> to vector<16x768xf32>
    %8 = arith.subf %0, %7 : vector<16x768xf32>
    %9 = arith.mulf %8, %8 : vector<16x768xf32>
    %cst_6 = arith.constant dense<0.000000e+00> : vector<16xf32>
    %10 = vector.multi_reduction <add>, %9, %cst_6 [1] : vector<16x768xf32> to vector<16xf32>
    %11 = vector.shape_cast %10 : vector<16xf32> to vector<16x1xf32>
    %cst_7 = arith.constant 7.680000e+02 : f32
    %12 = vector.broadcast %cst_7 : f32 to vector<16x1xf32>
    %13 = arith.divf %11, %12 : vector<16x1xf32>
    %cst_8 = arith.constant 9.99999996E-13 : f32
    %14 = vector.broadcast %cst_8 : f32 to vector<16x1xf32>
    %15 = arith.addf %13, %14 : vector<16x1xf32>
    %16 = math.rsqrt %15 : vector<16x1xf32>
    %17 = vector.broadcast %16 : vector<16x1xf32> to vector<16x768xf32>
    %18 = arith.mulf %8, %17 : vector<16x768xf32>
    %19 = vector.broadcast %1 : vector<1x768xf32> to vector<16x768xf32>
    %20 = arith.mulf %18, %19 : vector<16x768xf32>
    %21 = vector.broadcast %2 : vector<1x768xf32> to vector<16x768xf32>
    %22 = arith.addf %20, %21 : vector<16x768xf32>
    %23 = arith.truncf %22 : vector<16x768xf32> to vector<16x768xbf16>
    %c0_9 = arith.constant 0 : index
    %c0_10 = arith.constant 0 : index
    %24 = vector.load %arg4[%c0_9, %c0_10] : memref<16x768xbf16, #tpu.memory_space<vmem>>, vector<16x768xbf16>
    tpu.vector_store %arg4[%c0_9, %c0_10], %23 {strides = array<i32>} : memref<16x768xbf16, #tpu.memory_space<vmem>>, vector<16x768xbf16>,
    return
  }
  func.func @transform_0(%arg0: i32) -> (i32, i32) {
    %c0_i32 = arith.constant 0 : i32
    %c0_i32_0 = arith.constant 0 : i32
    return %arg0, %c0_i32 : i32, i32
  }
  func.func @transform_1(%arg0: i32) -> (i32, i32) {
    %c0_i32 = arith.constant 0 : i32
    %c0_i32_0 = arith.constant 0 : i32
    %c0_i32_1 = arith.constant 0 : i32
    return %c0_i32, %c0_i32_0 : i32, i32
  }
  func.func @transform_2(%arg0: i32) -> (i32, i32) {
    %c0_i32 = arith.constant 0 : i32
    %c0_i32_0 = arith.constant 0 : i32
    %c0_i32_1 = arith.constant 0 : i32
    return %c0_i32, %c0_i32_0 : i32, i32
  }
  func.func @transform_3(%arg0: i32) -> (i32, i32) {
    %c0_i32 = arith.constant 0 : i32
    %c0_i32_0 = arith.constant 0 : i32
    return %arg0, %c0_i32 : i32, i32
  }
}

</mosaic_0001>

<llo_original>
// kernel: tpu_custom_call.1
$region0: #{tpu_custom_call.1}
  #allocation0 [shape = 'u32[]', space=smem, size = 0x4, offset = 0x4, fixed_abs, tag = 'smem constant byte address 0x4 - core index']
  #allocation1 [shape = 'u32[144,128]{1,0:T(1,128)}', space=vmem, size = 0x12000, scoped, tag = 'internal scratch']
  %s0 = inlined_call_operand.hbm [shape: f32[16,768], index: 0, kind: input, shape index: {}]
  %s1 = inlined_call_operand.hbm [shape: f32[1,768], index: 1, kind: input, shape index: {}]
  %s2 = inlined_call_operand.vmem [shape: f32[1,768], index: 2, kind: input, shape index: {}]
  %s3 = inlined_call_operand.hbm [shape: bf16[16,768], index: 3, kind: output, shape index: {}]
  %s4 = sld [smem:[#allocation0]]
  $region30: #{tpu_custom_call.1} parent=0
    _
  %s6 = ssub.s32 1, %s4
  %s7 = scalar_select 0, %s6, %s4
  $region1: #{tpu_custom_call.1} parent=0
    #allocation2 [shape = 'u8[49152]{0}', space=vmem, size = 0xc000, scoped, tag = 'input window, operand 0, single buffered']
    #allocation3 [shape = 's32[1]{0}', space=sflag, size = 0x4, scoped, tag = 'scoped memory for tpu_custom_call.1']
    #allocation4 [shape = 's32[1]{0}', space=sflag, size = 0x4, scoped, tag = 'scoped memory for tpu_custom_call.1']
    #allocation5 [shape = 'u8[3072]{0}', space=vmem, size = 0xc00, scoped, tag = 'input window, operand 1, single buffered']
    #allocation6 [shape = 's32[1]{0}', space=sflag, size = 0x4, scoped, tag = 'scoped memory for tpu_custom_call.1']
    #allocation7 [shape = 'u8[24576]{0}', space=vmem, size = 0x6000, scoped, tag = 'output window, operand 0, single buffered']
    %8 = vsyncpa [#allocation3], 0
    %9 = vsyncpa [#allocation6], 0
    %10 = vsyncpa [#allocation4], 0
    // Predicated region
    $region2: #{tpu_custom_call.1} parent=1 // pred_check
      _
    $region3: #{tpu_custom_call.1} parent=1 // pred_check_branch
      %12 = sbr.rel (0) target = $region5
    $region4: #{tpu_custom_call.1} parent=1 // pred_region
      %s14 = ssub.s32 1536, 1536
      %15 = vsyncadd [#allocation3], %s14
      %s16 = sshll.u32 [#allocation2], 4
      %s17 = int_to_ptr.vmem [resolvable:$true] %s16
      %22 = dma.hbm_to_vmem [thread:$0]  %s0, 1536, %s17, [#allocation3], 768, 768, 48
    $region5: #{tpu_custom_call.1} parent=1 // pred_fallthru
      _
    // Predicated region
    $region6: #{tpu_custom_call.1} parent=1 // pred_check
      _
    $region7: #{tpu_custom_call.1} parent=1 // pred_check_branch
      %24 = sbr.rel (0) target = $region9
    $region8: #{tpu_custom_call.1} parent=1 // pred_region
      %s26 = ssub.s32 96, 96
      %27 = vsyncadd [#allocation6], %s26
      %s29 = sshll.u32 [#allocation5], 4
      %s30 = int_to_ptr.vmem [resolvable:$true] %s29
      %32 = dma.hbm_to_vmem [thread:$0]  %s1, 96, %s30, [#allocation6]
    $region9: #{tpu_custom_call.1} parent=1 // pred_fallthru
      _
    // Predicated region
    $region10: #{tpu_custom_call.1} parent=1 // pred_check
      _
    $region11: #{tpu_custom_call.1} parent=1 // pred_check_branch
      %34 = sbr.rel (0) target = $region13
    $region12: #{tpu_custom_call.1} parent=1 // pred_region
      _
    $region13: #{tpu_custom_call.1} parent=1 // pred_fallthru
      _
    // Predicated region
    $region14: #{tpu_custom_call.1} parent=1 // pred_check
      _
    $region15: #{tpu_custom_call.1} parent=1 // pred_check_branch
      %36 = sbr.rel (0) target = $region17
    $region16: #{tpu_custom_call.1} parent=1 // pred_region
      %37 = dma.done [#allocation3], 1536
    $region17: #{tpu_custom_call.1} parent=1 // pred_fallthru
      _
    // Predicated region
    $region18: #{tpu_custom_call.1} parent=1 // pred_check
      _
    $region19: #{tpu_custom_call.1} parent=1 // pred_check_branch
      %39 = sbr.rel (0) target = $region21
    $region20: #{tpu_custom_call.1} parent=1 // pred_region
      %40 = dma.done [#allocation6], 96
    $region21: #{tpu_custom_call.1} parent=1 // pred_fallthru
      _
    %v41 = vld [vmem:[#allocation2] sm:$0xff]
    %v42 = vld [vmem:[#allocation2 + $0x8] sm:$0xff]
    %v43 = vld [vmem:[#allocation2 + $0x10] sm:$0xff]
    %v44 = vld [vmem:[#allocation2 + $0x18] sm:$0xff]
    %v45 = vld [vmem:[#allocation2 + $0x20] sm:$0xff]
    %v46 = vld [vmem:[#allocation2 + $0x28] sm:$0xff]
    %v47 = vld [vmem:[#allocation2 + $0x30] sm:$0xff]
    %v48 = vld [vmem:[#allocation2 + $0x38] sm:$0xff]
    %v49 = vld [vmem:[#allocation2 + $0x40] sm:$0xff]
    %v50 = vld [vmem:[#allocation2 + $0x48] sm:$0xff]
    %v51 = vld [vmem:[#allocation2 + $0x50] sm:$0xff]
    %v52 = vld [vmem:[#allocation2 + $0x58] sm:$0xff]
    %v53 = vld [vmem:[#allocation5] sm:$0x3f]
    %v54 = vld [vmem:[%s2] sm:$0x3f]
    %v55 = vadd.f32 %v41, %v42
    %v56 = vadd.f32 %v55, %v43
    %v57 = vadd.f32 %v56, %v44
    %v58 = vadd.f32 %v57, %v45
    %v59 = vadd.f32 %v58, %v46
    %60 = vadd.xlane.f32.xlu0 %v59
    %v61 = vpop.xlane.xlu0 %60
    %v62 = vadd.f32 %v47, %v48
    %v63 = vadd.f32 %v62, %v49
    %v64 = vadd.f32 %v63, %v50
    %v65 = vadd.f32 %v64, %v51
    %v66 = vadd.f32 %v65, %v52
    %67 = vadd.xlane.f32.xlu0 %v66
    %v68 = vpop.xlane.xlu0 %67
    %v69 = vrcp.pop 768.0
    %v70 = vmul.f32 %v61, %v69
    %v71 = vmul.f32 %v68, %v69
    %v72 = vsub.f32 %v41, %v70
    %v73 = vsub.f32 %v42, %v70
    %v74 = vsub.f32 %v43, %v70
    %v75 = vsub.f32 %v44, %v70
    %v76 = vsub.f32 %v45, %v70
    %v77 = vsub.f32 %v46, %v70
    %v78 = vsub.f32 %v47, %v71
    %v79 = vsub.f32 %v48, %v71
    %v80 = vsub.f32 %v49, %v71
    %v81 = vsub.f32 %v50, %v71
    %v82 = vsub.f32 %v51, %v71
    %v83 = vsub.f32 %v52, %v71
    %v84 = vmul.f32 %v72, %v72
    %v85 = vmul.f32 %v73, %v73
    %v86 = vmul.f32 %v74, %v74
    %v87 = vmul.f32 %v75, %v75
    %v88 = vmul.f32 %v76, %v76
    %v89 = vmul.f32 %v77, %v77
    %v90 = vmul.f32 %v78, %v78
    %v91 = vmul.f32 %v79, %v79
    %v92 = vmul.f32 %v80, %v80
    %v93 = vmul.f32 %v81, %v81
    %v94 = vmul.f32 %v82, %v82
    %v95 = vmul.f32 %v83, %v83
    %v96 = vadd.f32 %v84, %v85
    %v97 = vadd.f32 %v96, %v86
    %v98 = vadd.f32 %v97, %v87
    %v99 = vadd.f32 %v98, %v88
    %v100 = vadd.f32 %v99, %v89
    %101 = vadd.xlane.f32.xlu0 %v100
    %v102 = vpop.xlane.xlu0 %101
    %v103 = vadd.f32 %v90, %v91
    %v104 = vadd.f32 %v103, %v92
    %v105 = vadd.f32 %v104, %v93
    %v106 = vadd.f32 %v105, %v94
    %v107 = vadd.f32 %v106, %v95
    %108 = vadd.xlane.f32.xlu0 %v107
    %v109 = vpop.xlane.xlu0 %108
    %v110 = vmul.f32 %v102, %v69
    %v111 = vmul.f32 %v109, %v69
    %v112 = vadd.f32 %v110, 1e-12
    %v113 = vadd.f32 %v111, 1e-12
    %v114 = vrsqrt.pop %v112
    %v115 = vrsqrt.pop %v113
    %v116 = vmul.f32 %v72, %v114
    %v117 = vmul.f32 %v73, %v114
    %v118 = vmul.f32 %v74, %v114
    %v119 = vmul.f32 %v75, %v114
    %v120 = vmul.f32 %v76, %v114
    %v121 = vmul.f32 %v77, %v114
    %v122 = vmul.f32 %v78, %v115
    %v123 = vmul.f32 %v79, %v115
    %v124 = vmul.f32 %v80, %v115
    %v125 = vmul.f32 %v81, %v115
    %v126 = vmul.f32 %v82, %v115
    %v127 = vmul.f32 %v83, %v115
    %v129 = vlaneseq
    %v130 = vshrl.u32 %v129, 7
    %v131 = vsub.s32 0, %v130
    %v132 = vrot.slane %v53, %v131
    %v133 = vlaneseq
    %v134 = vshrl.u32 %v133, 7
    %v135 = vsub.s32 1, %v134
    %v136 = vrot.slane %v53, %v135
    %v137 = vlaneseq
    %v138 = vshrl.u32 %v137, 7
    %v139 = vsub.s32 2, %v138
    %v140 = vrot.slane %v53, %v139
    %v141 = vlaneseq
    %v142 = vshrl.u32 %v141, 7
    %v143 = vsub.s32 3, %v142
    %v144 = vrot.slane %v53, %v143
    %v145 = vlaneseq
    %v146 = vshrl.u32 %v145, 7
    %v147 = vsub.s32 4, %v146
    %v148 = vrot.slane %v53, %v147
    %v149 = vlaneseq
    %v150 = vshrl.u32 %v149, 7
    %v151 = vsub.s32 5, %v150
    %v152 = vrot.slane %v53, %v151
    %v159 = vmul.f32 %v116, %v132
    %v160 = vmul.f32 %v117, %v136
    %v161 = vmul.f32 %v118, %v140
    %v162 = vmul.f32 %v119, %v144
    %v163 = vmul.f32 %v120, %v148
    %v164 = vmul.f32 %v121, %v152
    %v165 = vmul.f32 %v122, %v132
    %v166 = vmul.f32 %v123, %v136
    %v167 = vmul.f32 %v124, %v140
    %v168 = vmul.f32 %v125, %v144
    %v169 = vmul.f32 %v126, %v148
    %v170 = vmul.f32 %v127, %v152
    %v172 = vlaneseq
    %v173 = vshrl.u32 %v172, 7
    %v174 = vsub.s32 0, %v173
    %v175 = vrot.slane %v54, %v174
    %v176 = vlaneseq
    %v177 = vshrl.u32 %v176, 7
    %v178 = vsub.s32 1, %v177
    %v179 = vrot.slane %v54, %v178
    %v180 = vlaneseq
    %v181 = vshrl.u32 %v180, 7
    %v182 = vsub.s32 2, %v181
    %v183 = vrot.slane %v54, %v182
    %v184 = vlaneseq
    %v185 = vshrl.u32 %v184, 7
    %v186 = vsub.s32 3, %v185
    %v187 = vrot.slane %v54, %v186
    %v188 = vlaneseq
    %v189 = vshrl.u32 %v188, 7
    %v190 = vsub.s32 4, %v189
    %v191 = vrot.slane %v54, %v190
    %v192 = vlaneseq
    %v193 = vshrl.u32 %v192, 7
    %v194 = vsub.s32 5, %v193
    %v195 = vrot.slane %v54, %v194
    %v202 = vadd.f32 %v159, %v175
    %v203 = vadd.f32 %v160, %v179
    %v204 = vadd.f32 %v161, %v183
    %v205 = vadd.f32 %v162, %v187
    %v206 = vadd.f32 %v163, %v191
    %v207 = vadd.f32 %v164, %v195
    %v208 = vadd.f32 %v165, %v175
    %v209 = vadd.f32 %v166, %v179
    %v210 = vadd.f32 %v167, %v183
    %v211 = vadd.f32 %v168, %v187
    %v212 = vadd.f32 %v169, %v191
    %v213 = vadd.f32 %v170, %v195
    %v214 = vpack.c.bf16 %v208, %v202
    %v215 = vpack.c.bf16 %v209, %v203
    %v216 = vpack.c.bf16 %v210, %v204
    %v217 = vpack.c.bf16 %v211, %v205
    %v218 = vpack.c.bf16 %v212, %v206
    %v219 = vpack.c.bf16 %v213, %v207
    %v226 = vunpack.c.l.b16 %v214
    %v227 = vunpack.c.l.b16 %v215
    %v228 = vunpack.c.l.b16 %v216
    %v229 = vunpack.c.l.b16 %v217
    %v230 = vunpack.c.l.b16 %v218
    %v231 = vunpack.c.l.b16 %v219
    %v232 = vunpack.c.h.b16 %v214
    %v233 = vunpack.c.h.b16 %v215
    %v234 = vunpack.c.h.b16 %v216
    %v235 = vunpack.c.h.b16 %v217
    %v236 = vunpack.c.h.b16 %v218
    %v237 = vunpack.c.h.b16 %v219
    %v238 = vpack.c.b16 %v227, %v226
    %v239 = vpack.c.b16 %v229, %v228
    %v240 = vpack.c.b16 %v231, %v230
    %v241 = vpack.c.b16 %v233, %v232
    %v242 = vpack.c.b16 %v235, %v234
    %v243 = vpack.c.b16 %v237, %v236
    %250 = vst [vmem:[#allocation7] sm:$0xff] %v238
    %251 = vst [vmem:[#allocation7 + $0x8] sm:$0xff] %v239
    %252 = vst [vmem:[#allocation7 + $0x10] sm:$0xff] %v240
    %253 = vst [vmem:[#allocation7 + $0x18] sm:$0xff] %v241
    %254 = vst [vmem:[#allocation7 + $0x20] sm:$0xff] %v242
    %255 = vst [vmem:[#allocation7 + $0x28] sm:$0xff] %v243
    // Predicated region
    $region22: #{tpu_custom_call.1} parent=1 // pred_check
      _
    $region23: #{tpu_custom_call.1} parent=1 // pred_check_branch
      %257 = sbr.rel (0) target = $region25
    $region24: #{tpu_custom_call.1} parent=1 // pred_region
      %s259 = ssub.s32 768, 768
      %260 = vsyncadd [#allocation4], %s259
      %s261 = sshll.u32 [#allocation7], 4
      %s262 = int_to_ptr.vmem [resolvable:$true] %s261
      %267 = dma.vmem_to_hbm [thread:$0]  %s262, 768, %s3, [#allocation4], 384, 384, 24
    $region25: #{tpu_custom_call.1} parent=1 // pred_fallthru
      _
    // Predicated region
    $region26: #{tpu_custom_call.1} parent=1 // pred_check
      _
    $region27: #{tpu_custom_call.1} parent=1 // pred_check_branch
      %269 = sbr.rel (0) target = $region29
    $region28: #{tpu_custom_call.1} parent=1 // pred_region
      %270 = dma.done [#allocation4], 768
    $region29: #{tpu_custom_call.1} parent=1 // pred_fallthru
      _
    %271 = vsyncpa [#allocation3], 1
    %272 = vsyncpa [#allocation6], 1
    %273 = vsyncpa [#allocation4], 1

</llo_original>
